<compile_context>
chip_gen: v6e
topology: v6e:2x2x1
jax: 0.10.0
libtpu: 0.0.40
codegen_flags: <defaults>
</compile_context>

<pallas_src>
import jax
import jax.numpy as jnp
from jax.experimental import pallas as pl
from jax.experimental.pallas import tpu as pltpu

_BOS_TOKEN = 2  # the model always prepends token id 2


def _bos_attn_kernel(tok_ref, stab_ref, vo_ref, out_ref):
    """Row-0 (BOS query) attention + residual from raw token ids.

    tok_ref:  (bb, S)  int32 token ids (without the BOS prefix)
    stab_ref: (1, H)   score_tab[t]  = (q_BOS . k_t) / sqrt(D)
    vo_ref:   (H, H)   vo_tab[t, :]  = v_t @ Wo^T
    out_ref:  (bb, H)  attention output for row 0 + residual one-hot(BOS)
    """
    tok = tok_ref[...]                       # (bb, S)
    stab = stab_ref[...]                     # (1, H)
    vo = vo_ref[...]                         # (H, H)
    bb, _ = tok.shape
    H = vo.shape[0]

    # Per-class token counts.  Positions with the same token id have the same
    # score, so the softmax over S+1 positions collapses to a count-weighted
    # softmax over the H classes.
    h_iota = jax.lax.broadcasted_iota(jnp.int32, (bb, H), 1)
    is_bos = (h_iota == _BOS_TOKEN).astype(jnp.float32)      # (bb, H)
    counts = is_bos                                          # BOS at position 0
    for t in range(H):                                       # H <= 8, unrolled
        c_t = jnp.sum((tok == t).astype(jnp.float32), axis=-1, keepdims=True)  # (bb,1)
        counts = counts + jnp.where(h_iota == t, c_t, 0.0)

    # Stable softmax over the classes that actually occur (matches reference).
    s = jnp.broadcast_to(stab, (bb, H))
    m = jnp.max(jnp.where(counts > 0.0, s, -jnp.inf), axis=-1, keepdims=True)  # (bb,1)
    e = counts * jnp.exp(s - m)                              # (bb, H)
    denom = jnp.sum(e, axis=-1, keepdims=True)               # (bb, 1)
    w = e / denom                                            # exact divide (accuracy)

    # y[b,:] = sum_t w[b,t] * vo_tab[t,:]  -- 8 unrolled VPU multiply-adds,
    # keeping this trivial contraction off the MXU.
    y = jnp.zeros((bb, H), jnp.float32)
    for t in range(H):
        y = y + w[:, t:t + 1] * vo[t:t + 1, :]

    # Residual: embedded row 0 is one-hot(BOS) -> +1 in the BOS column.
    out_ref[...] = (y + is_bos).astype(out_ref.dtype)


def _pick_block(B: int, S: int, H: int):
    """VMEM-budget-driven batch block size.  Returns (bb, padded_B)."""
    # Per-batch-element bytes: double-buffered tok + out blocks plus a few
    # (bb, S)/(bb, H) f32 temporaries live inside the kernel.
    per_b = 2 * S * 4 + 2 * H * 4 + 2 * S * 4 + 6 * H * 4
    budget = 8 * 1024 * 1024       # conservative: well under v5e's 16 MiB default
    bb = max(1, budget // max(per_b, 1))
    if bb >= B:
        return B, B                # single grid step, full-dim blocks (no (8,128) rule)
    bb = max(8, (bb // 8) * 8)     # blocked sublane dim must be a multiple of 8
    b_pad = ((B + bb - 1) // bb) * bb
    return bb, b_pad


def init_params(key, vocab_size: int, head_dim: int):
    hidden_dim = vocab_size + 1
    k_q, k_k, k_v, k_o = jax.random.split(key, 4)
    s_h = 1.0 / (hidden_dim ** 0.5)
    s_d = 1.0 / (head_dim ** 0.5)
    params = {
        "hidden_dim": hidden_dim,
        "head_dim": head_dim,
        # PyTorch nn.Linear stores weight as (out_features, in_features)
        "w_q": jax.random.uniform(k_q, (head_dim, hidden_dim), jnp.float32, -s_h, s_h),
        "w_k": jax.random.uniform(k_k, (head_dim, hidden_dim), jnp.float32, -s_h, s_h),
        "w_v": jax.random.uniform(k_v, (head_dim, hidden_dim), jnp.float32, -s_h, s_h),
        "w_o": jax.random.uniform(k_o, (hidden_dim, head_dim), jnp.float32, -s_d, s_d),
        # frozen identity embedding / unembedding (used by the reference only;
        # the kernel path folds them away because they are identities)
        "w_embed": jnp.eye(hidden_dim, dtype=jnp.float32),
        "w_unembed": jnp.eye(hidden_dim, dtype=jnp.float32),
        # TODO(synk): self.mlp (Linear->ReLU->Linear) exists in __init__ but is
        # never called in forward(), so it is intentionally not instantiated.
    }
    return params


def single_head_transformer_no_embedding(tokens, params):
    """tokens: (B, S) int token ids. Returns (B, vocab_size+1) float32."""
    B, S = tokens.shape
    H = params["hidden_dim"]
    D = params["head_dim"]
    # The in-kernel residual writes +1 at column _BOS_TOKEN; guard the assumption.
    assert H > _BOS_TOKEN, "hidden_dim must exceed the BOS token id"

    wq, wk, wv, wo = params["w_q"], params["w_k"], params["w_v"], params["w_o"]

    # Trace-time algebraic folds (all tiny):
    #   q0 = Wq^T[BOS]   (row 0 of the embedded sequence is always one-hot BOS)
    #   score_tab[t] = (q0 . Wk^T[t]) / sqrt(D)          -> (H,)
    #   vo_tab[t, :] = Wv^T[t] @ Wo^T                    -> (H, H)
    q0 = wq[:, _BOS_TOKEN]                                    # (D,)
    score_tab = ((q0 @ wk) * (1.0 / (D ** 0.5))).reshape(1, H).astype(jnp.float32)
    vo_tab = (wv.T @ wo.T).astype(jnp.float32)                # (H, H)

    tok = tokens.astype(jnp.int32)

    # VMEM-budget-driven batch blocking (one step for small B; multiple-of-8
    # blocks with batch padding otherwise).
    bb, b_pad = _pick_block(B, S, H)
    if b_pad != B:
        tok = jnp.pad(tok, ((0, b_pad - B), (0, 0)))
    num_blocks = b_pad // bb

    out = pl.pallas_call(
        _bos_attn_kernel,
        out_shape=jax.ShapeDtypeStruct((b_pad, H), jnp.float32),
        grid_spec=pltpu.PrefetchScalarGridSpec(
            num_scalar_prefetch=0,
            grid=(num_blocks,),
            in_specs=[
                pl.BlockSpec((bb, S), lambda i: (i, 0)),
                pl.BlockSpec((1, H), lambda i: (0, 0)),   # grid-invariant, resident
                pl.BlockSpec((H, H), lambda i: (0, 0)),   # grid-invariant, resident
            ],
            out_specs=pl.BlockSpec((bb, H), lambda i: (i, 0)),
        ),
        compiler_params=pltpu.CompilerParams(
            dimension_semantics=("parallel",),            # lets v7x split batch blocks
            vmem_limit_bytes=32 * 1024 * 1024,            # <= every generation's VMEM
        ),
    )(tok, score_tab, vo_tab)

    # unembedding is identity (no bias) and head_dim_mask is all ones: dropped.
    return out[:B]


def _reference(tokens, params):
    """Pure-JAX reference mirroring the PyTorch forward exactly."""
    D = params["head_dim"]
    tok = jnp.concatenate(
        [jnp.full((tokens.shape[0], 1), _BOS_TOKEN, tokens.dtype), tokens], axis=1)
    y = params["w_embed"][tok]                                   # embedding lookup
    q = y @ params["w_q"].T
    k = y @ params["w_k"].T
    v = y @ params["w_v"].T
    a = jax.nn.softmax(q @ jnp.swapaxes(k, -1, -2) / (D ** 0.5), axis=-1)
    h = a @ v
    y = (jnp.ones((D,)) * h) @ params["w_o"].T + y               # ones head_dim_mask
    return y[:, 0, :] @ params["w_unembed"].T


if __name__ == "__main__":
    vocab_size = 7          # hidden_dim = vocab_size + 1 = 8
    head_dim = 4
    batch = 2
    seq = 7                 # -> S+1 = 8 inside the model

    key = jax.random.PRNGKey(0)
    k_param, k_tok = jax.random.split(key)
    params = init_params(k_param, vocab_size, head_dim)
    tokens = jax.random.randint(k_tok, (batch, seq), 0, vocab_size, dtype=jnp.int32)

    out = single_head_transformer_no_embedding(tokens, params)
    out = jax.block_until_ready(out)

    ref = jax.block_until_ready(_reference(tokens, params))
    assert out.shape == (batch, vocab_size + 1)
    # exact softmax divide now -> tight tolerance vs. the reference
    assert jnp.allclose(out, ref, atol=1e-5, rtol=1e-5), "mismatch vs reference"

    print("KERNEL_OK")
</pallas_src>

<mosaic_0001>
module attributes {stable_mosaic.version = 11 : i64} {
  func.func @_bos_attn_kernel(%arg0: i32, %arg1: memref<2x7xi32, #tpu.memory_space<vmem>>, %arg2: memref<1x8xf32, #tpu.memory_space<vmem>>, %arg3: memref<8x8xf32, #tpu.memory_space<vmem>>, %arg4: memref<2x8xf32, #tpu.memory_space<vmem>>) attributes {dimension_semantics = [#tpu.dimension_semantics<parallel>], iteration_bounds = array<i64: 1>, scalar_prefetch = 0 : i64, scratch_operands = 0 : i64, tpu.core_type = #tpu.core_type<tc>, window_params = [{transform_indices = @transform_0, window_bounds = array<i64: 2, 7>}, {pipeline_mode = #tpu.pipeline_mode<synchronous>, transform_indices = @transform_1, window_bounds = array<i64: 1, 8>}, {pipeline_mode = #tpu.pipeline_mode<synchronous>, transform_indices = @transform_2, window_bounds = array<i64: 8, 8>}, {transform_indices = @transform_3, window_bounds = array<i64: 2, 8>}]} {
    %c0 = arith.constant 0 : index
    %c0_0 = arith.constant 0 : index
    %0 = vector.load %arg1[%c0, %c0_0] : memref<2x7xi32, #tpu.memory_space<vmem>>, vector<2x7xi32>
    %c0_1 = arith.constant 0 : index
    %c0_2 = arith.constant 0 : index
    %1 = vector.load %arg2[%c0_1, %c0_2] : memref<1x8xf32, #tpu.memory_space<vmem>>, vector<1x8xf32>
    %c0_3 = arith.constant 0 : index
    %c0_4 = arith.constant 0 : index
    %2 = vector.load %arg3[%c0_3, %c0_4] : memref<8x8xf32, #tpu.memory_space<vmem>>, vector<8x8xf32>
    %3 = tpu.iota {dimensions = array<i32: 1>} : vector<2x8xi32>
    %c2_i32 = arith.constant 2 : i32
    %4 = vector.broadcast %c2_i32 : i32 to vector<2x8xi32>
    %5 = arith.cmpi eq, %3, %4 : vector<2x8xi32>
    %6 = arith.extui %5 : vector<2x8xi1> to vector<2x8xi32>
    %7 = arith.sitofp %6 : vector<2x8xi32> to vector<2x8xf32>
    %c0_i32 = arith.constant 0 : i32
    %8 = vector.broadcast %c0_i32 : i32 to vector<2x7xi32>
    %9 = arith.cmpi eq, %0, %8 : vector<2x7xi32>
    %10 = arith.extui %9 : vector<2x7xi1> to vector<2x7xi32>
    %11 = arith.sitofp %10 : vector<2x7xi32> to vector<2x7xf32>
    %cst = arith.constant dense<0.000000e+00> : vector<2xf32>
    %12 = vector.multi_reduction <add>, %11, %cst [1] : vector<2x7xf32> to vector<2xf32>
    %13 = vector.shape_cast %12 : vector<2xf32> to vector<2x1xf32>
    %c0_i32_5 = arith.constant 0 : i32
    %14 = vector.broadcast %c0_i32_5 : i32 to vector<2x8xi32>
    %15 = arith.cmpi eq, %3, %14 : vector<2x8xi32>
    %cst_6 = arith.constant 0.000000e+00 : f32
    %16 = vector.shape_cast %13 : vector<2x1xf32> to vector<2x1xf32>
    %17 = vector.broadcast %16 : vector<2x1xf32> to vector<2x8xf32>
    %18 = vector.broadcast %cst_6 : f32 to vector<2x8xf32>
    %19 = arith.select %15, %17, %18 : vector<2x8xi1>, vector<2x8xf32>
    %20 = arith.addf %7, %19 : vector<2x8xf32>
    %c1_i32 = arith.constant 1 : i32
    %21 = vector.broadcast %c1_i32 : i32 to vector<2x7xi32>
    %22 = arith.cmpi eq, %0, %21 : vector<2x7xi32>
    %23 = arith.extui %22 : vector<2x7xi1> to vector<2x7xi32>
    %24 = arith.sitofp %23 : vector<2x7xi32> to vector<2x7xf32>
    %cst_7 = arith.constant dense<0.000000e+00> : vector<2xf32>
    %25 = vector.multi_reduction <add>, %24, %cst_7 [1] : vector<2x7xf32> to vector<2xf32>
    %26 = vector.shape_cast %25 : vector<2xf32> to vector<2x1xf32>
    %c1_i32_8 = arith.constant 1 : i32
    %27 = vector.broadcast %c1_i32_8 : i32 to vector<2x8xi32>
    %28 = arith.cmpi eq, %3, %27 : vector<2x8xi32>
    %cst_9 = arith.constant 0.000000e+00 : f32
    %29 = vector.shape_cast %26 : vector<2x1xf32> to vector<2x1xf32>
    %30 = vector.broadcast %29 : vector<2x1xf32> to vector<2x8xf32>
    %31 = vector.broadcast %cst_9 : f32 to vector<2x8xf32>
    %32 = arith.select %28, %30, %31 : vector<2x8xi1>, vector<2x8xf32>
    %33 = arith.addf %20, %32 : vector<2x8xf32>
    %c2_i32_10 = arith.constant 2 : i32
    %34 = vector.broadcast %c2_i32_10 : i32 to vector<2x7xi32>
    %35 = arith.cmpi eq, %0, %34 : vector<2x7xi32>
    %36 = arith.extui %35 : vector<2x7xi1> to vector<2x7xi32>
    %37 = arith.sitofp %36 : vector<2x7xi32> to vector<2x7xf32>
    %cst_11 = arith.constant dense<0.000000e+00> : vector<2xf32>
    %38 = vector.multi_reduction <add>, %37, %cst_11 [1] : vector<2x7xf32> to vector<2xf32>
    %39 = vector.shape_cast %38 : vector<2xf32> to vector<2x1xf32>
    %c2_i32_12 = arith.constant 2 : i32
    %40 = vector.broadcast %c2_i32_12 : i32 to vector<2x8xi32>
    %41 = arith.cmpi eq, %3, %40 : vector<2x8xi32>
    %cst_13 = arith.constant 0.000000e+00 : f32
    %42 = vector.shape_cast %39 : vector<2x1xf32> to vector<2x1xf32>
    %43 = vector.broadcast %42 : vector<2x1xf32> to vector<2x8xf32>
    %44 = vector.broadcast %cst_13 : f32 to vector<2x8xf32>
    %45 = arith.select %41, %43, %44 : vector<2x8xi1>, vector<2x8xf32>
    %46 = arith.addf %33, %45 : vector<2x8xf32>
    %c3_i32 = arith.constant 3 : i32
    %47 = vector.broadcast %c3_i32 : i32 to vector<2x7xi32>
    %48 = arith.cmpi eq, %0, %47 : vector<2x7xi32>
    %49 = arith.extui %48 : vector<2x7xi1> to vector<2x7xi32>
    %50 = arith.sitofp %49 : vector<2x7xi32> to vector<2x7xf32>
    %cst_14 = arith.constant dense<0.000000e+00> : vector<2xf32>
    %51 = vector.multi_reduction <add>, %50, %cst_14 [1] : vector<2x7xf32> to vector<2xf32>
    %52 = vector.shape_cast %51 : vector<2xf32> to vector<2x1xf32>
    %c3_i32_15 = arith.constant 3 : i32
    %53 = vector.broadcast %c3_i32_15 : i32 to vector<2x8xi32>
    %54 = arith.cmpi eq, %3, %53 : vector<2x8xi32>
    %cst_16 = arith.constant 0.000000e+00 : f32
    %55 = vector.shape_cast %52 : vector<2x1xf32> to vector<2x1xf32>
    %56 = vector.broadcast %55 : vector<2x1xf32> to vector<2x8xf32>
    %57 = vector.broadcast %cst_16 : f32 to vector<2x8xf32>
    %58 = arith.select %54, %56, %57 : vector<2x8xi1>, vector<2x8xf32>
    %59 = arith.addf %46, %58 : vector<2x8xf32>
    %c4_i32 = arith.constant 4 : i32
    %60 = vector.broadcast %c4_i32 : i32 to vector<2x7xi32>
    %61 = arith.cmpi eq, %0, %60 : vector<2x7xi32>
    %62 = arith.extui %61 : vector<2x7xi1> to vector<2x7xi32>
    %63 = arith.sitofp %62 : vector<2x7xi32> to vector<2x7xf32>
    %cst_17 = arith.constant dense<0.000000e+00> : vector<2xf32>
    %64 = vector.multi_reduction <add>, %63, %cst_17 [1] : vector<2x7xf32> to vector<2xf32>
    %65 = vector.shape_cast %64 : vector<2xf32> to vector<2x1xf32>
    %c4_i32_18 = arith.constant 4 : i32
    %66 = vector.broadcast %c4_i32_18 : i32 to vector<2x8xi32>
    %67 = arith.cmpi eq, %3, %66 : vector<2x8xi32>
    %cst_19 = arith.constant 0.000000e+00 : f32
    %68 = vector.shape_cast %65 : vector<2x1xf32> to vector<2x1xf32>
    %69 = vector.broadcast %68 : vector<2x1xf32> to vector<2x8xf32>
    %70 = vector.broadcast %cst_19 : f32 to vector<2x8xf32>
    %71 = arith.select %67, %69, %70 : vector<2x8xi1>, vector<2x8xf32>
    %72 = arith.addf %59, %71 : vector<2x8xf32>
    %c5_i32 = arith.constant 5 : i32
    %73 = vector.broadcast %c5_i32 : i32 to vector<2x7xi32>
    %74 = arith.cmpi eq, %0, %73 : vector<2x7xi32>
    %75 = arith.extui %74 : vector<2x7xi1> to vector<2x7xi32>
    %76 = arith.sitofp %75 : vector<2x7xi32> to vector<2x7xf32>
    %cst_20 = arith.constant dense<0.000000e+00> : vector<2xf32>
    %77 = vector.multi_reduction <add>, %76, %cst_20 [1] : vector<2x7xf32> to vector<2xf32>
    %78 = vector.shape_cast %77 : vector<2xf32> to vector<2x1xf32>
    %c5_i32_21 = arith.constant 5 : i32
    %79 = vector.broadcast %c5_i32_21 : i32 to vector<2x8xi32>
    %80 = arith.cmpi eq, %3, %79 : vector<2x8xi32>
    %cst_22 = arith.constant 0.000000e+00 : f32
    %81 = vector.shape_cast %78 : vector<2x1xf32> to vector<2x1xf32>
    %82 = vector.broadcast %81 : vector<2x1xf32> to vector<2x8xf32>
    %83 = vector.broadcast %cst_22 : f32 to vector<2x8xf32>
    %84 = arith.select %80, %82, %83 : vector<2x8xi1>, vector<2x8xf32>
    %85 = arith.addf %72, %84 : vector<2x8xf32>
    %c6_i32 = arith.constant 6 : i32
    %86 = vector.broadcast %c6_i32 : i32 to vector<2x7xi32>
    %87 = arith.cmpi eq, %0, %86 : vector<2x7xi32>
    %88 = arith.extui %87 : vector<2x7xi1> to vector<2x7xi32>
    %89 = arith.sitofp %88 : vector<2x7xi32> to vector<2x7xf32>
    %cst_23 = arith.constant dense<0.000000e+00> : vector<2xf32>
    %90 = vector.multi_reduction <add>, %89, %cst_23 [1] : vector<2x7xf32> to vector<2xf32>
    %91 = vector.shape_cast %90 : vector<2xf32> to vector<2x1xf32>
    %c6_i32_24 = arith.constant 6 : i32
    %92 = vector.broadcast %c6_i32_24 : i32 to vector<2x8xi32>
    %93 = arith.cmpi eq, %3, %92 : vector<2x8xi32>
    %cst_25 = arith.constant 0.000000e+00 : f32
    %94 = vector.shape_cast %91 : vector<2x1xf32> to vector<2x1xf32>
    %95 = vector.broadcast %94 : vector<2x1xf32> to vector<2x8xf32>
    %96 = vector.broadcast %cst_25 : f32 to vector<2x8xf32>
    %97 = arith.select %93, %95, %96 : vector<2x8xi1>, vector<2x8xf32>
    %98 = arith.addf %85, %97 : vector<2x8xf32>
    %c7_i32 = arith.constant 7 : i32
    %99 = vector.broadcast %c7_i32 : i32 to vector<2x7xi32>
    %100 = arith.cmpi eq, %0, %99 : vector<2x7xi32>
    %101 = arith.extui %100 : vector<2x7xi1> to vector<2x7xi32>
    %102 = arith.sitofp %101 : vector<2x7xi32> to vector<2x7xf32>
    %cst_26 = arith.constant dense<0.000000e+00> : vector<2xf32>
    %103 = vector.multi_reduction <add>, %102, %cst_26 [1] : vector<2x7xf32> to vector<2xf32>
    %104 = vector.shape_cast %103 : vector<2xf32> to vector<2x1xf32>
    %c7_i32_27 = arith.constant 7 : i32
    %105 = vector.broadcast %c7_i32_27 : i32 to vector<2x8xi32>
    %106 = arith.cmpi eq, %3, %105 : vector<2x8xi32>
    %cst_28 = arith.constant 0.000000e+00 : f32
    %107 = vector.shape_cast %104 : vector<2x1xf32> to vector<2x1xf32>
    %108 = vector.broadcast %107 : vector<2x1xf32> to vector<2x8xf32>
    %109 = vector.broadcast %cst_28 : f32 to vector<2x8xf32>
    %110 = arith.select %106, %108, %109 : vector<2x8xi1>, vector<2x8xf32>
    %111 = arith.addf %98, %110 : vector<2x8xf32>
    %112 = vector.shape_cast %1 : vector<1x8xf32> to vector<1x8xf32>
    %113 = vector.broadcast %112 : vector<1x8xf32> to vector<2x8xf32>
    %cst_29 = arith.constant 0.000000e+00 : f32
    %114 = vector.broadcast %cst_29 : f32 to vector<2x8xf32>
    %115 = arith.cmpf ogt, %111, %114 : vector<2x8xf32>
    %cst_30 = arith.constant 0xFF800000 : f32
    %116 = vector.broadcast %cst_30 : f32 to vector<2x8xf32>
    %117 = arith.select %115, %113, %116 : vector<2x8xi1>, vector<2x8xf32>
    %cst_31 = arith.constant dense<0xFF800000> : vector<2xf32>
    %118 = vector.multi_reduction <maximumf>, %117, %cst_31 [1] : vector<2x8xf32> to vector<2xf32>
    %119 = vector.shape_cast %118 : vector<2xf32> to vector<2x1xf32>
    %120 = vector.broadcast %119 : vector<2x1xf32> to vector<2x8xf32>
    %121 = arith.subf %113, %120 : vector<2x8xf32>
    %122 = math.exp %121 : vector<2x8xf32>
    %123 = arith.mulf %111, %122 : vector<2x8xf32>
    %cst_32 = arith.constant dense<0.000000e+00> : vector<2xf32>
    %124 = vector.multi_reduction <add>, %123, %cst_32 [1] : vector<2x8xf32> to vector<2xf32>
    %125 = vector.shape_cast %124 : vector<2xf32> to vector<2x1xf32>
    %126 = vector.broadcast %125 : vector<2x1xf32> to vector<2x8xf32>
    %127 = arith.divf %123, %126 : vector<2x8xf32>
    %cst_33 = arith.constant 0.000000e+00 : f32
    %128 = vector.broadcast %cst_33 : f32 to vector<2x8xf32>
    %129 = vector.extract_strided_slice %127 {offsets = [0, 0], sizes = [2, 1], strides = [1, 1]} : vector<2x8xf32> to vector<2x1xf32>
    %130 = vector.extract_strided_slice %2 {offsets = [0, 0], sizes = [1, 8], strides = [1, 1]} : vector<8x8xf32> to vector<1x8xf32>
    %131 = vector.broadcast %129 : vector<2x1xf32> to vector<2x8xf32>
    %132 = vector.broadcast %130 : vector<1x8xf32> to vector<2x8xf32>
    %133 = arith.mulf %131, %132 : vector<2x8xf32>
    %134 = arith.addf %128, %133 : vector<2x8xf32>
    %135 = vector.extract_strided_slice %127 {offsets = [0, 1], sizes = [2, 1], strides = [1, 1]} : vector<2x8xf32> to vector<2x1xf32>
    %136 = vector.extract_strided_slice %2 {offsets = [1, 0], sizes = [1, 8], strides = [1, 1]} : vector<8x8xf32> to vector<1x8xf32>
    %137 = vector.broadcast %135 : vector<2x1xf32> to vector<2x8xf32>
    %138 = vector.broadcast %136 : vector<1x8xf32> to vector<2x8xf32>
    %139 = arith.mulf %137, %138 : vector<2x8xf32>
    %140 = arith.addf %134, %139 : vector<2x8xf32>
    %141 = vector.extract_strided_slice %127 {offsets = [0, 2], sizes = [2, 1], strides = [1, 1]} : vector<2x8xf32> to vector<2x1xf32>
    %142 = vector.extract_strided_slice %2 {offsets = [2, 0], sizes = [1, 8], strides = [1, 1]} : vector<8x8xf32> to vector<1x8xf32>
    %143 = vector.broadcast %141 : vector<2x1xf32> to vector<2x8xf32>
    %144 = vector.broadcast %142 : vector<1x8xf32> to vector<2x8xf32>
    %145 = arith.mulf %143, %144 : vector<2x8xf32>
    %146 = arith.addf %140, %145 : vector<2x8xf32>
    %147 = vector.extract_strided_slice %127 {offsets = [0, 3], sizes = [2, 1], strides = [1, 1]} : vector<2x8xf32> to vector<2x1xf32>
    %148 = vector.extract_strided_slice %2 {offsets = [3, 0], sizes = [1, 8], strides = [1, 1]} : vector<8x8xf32> to vector<1x8xf32>
    %149 = vector.broadcast %147 : vector<2x1xf32> to vector<2x8xf32>
    %150 = vector.broadcast %148 : vector<1x8xf32> to vector<2x8xf32>
    %151 = arith.mulf %149, %150 : vector<2x8xf32>
    %152 = arith.addf %146, %151 : vector<2x8xf32>
    %153 = vector.extract_strided_slice %127 {offsets = [0, 4], sizes = [2, 1], strides = [1, 1]} : vector<2x8xf32> to vector<2x1xf32>
    %154 = vector.extract_strided_slice %2 {offsets = [4, 0], sizes = [1, 8], strides = [1, 1]} : vector<8x8xf32> to vector<1x8xf32>
    %155 = vector.broadcast %153 : vector<2x1xf32> to vector<2x8xf32>
    %156 = vector.broadcast %154 : vector<1x8xf32> to vector<2x8xf32>
    %157 = arith.mulf %155, %156 : vector<2x8xf32>
    %158 = arith.addf %152, %157 : vector<2x8xf32>
    %159 = vector.extract_strided_slice %127 {offsets = [0, 5], sizes = [2, 1], strides = [1, 1]} : vector<2x8xf32> to vector<2x1xf32>
    %160 = vector.extract_strided_slice %2 {offsets = [5, 0], sizes = [1, 8], strides = [1, 1]} : vector<8x8xf32> to vector<1x8xf32>
    %161 = vector.broadcast %159 : vector<2x1xf32> to vector<2x8xf32>
    %162 = vector.broadcast %160 : vector<1x8xf32> to vector<2x8xf32>
    %163 = arith.mulf %161, %162 : vector<2x8xf32>
    %164 = arith.addf %158, %163 : vector<2x8xf32>
    %165 = vector.extract_strided_slice %127 {offsets = [0, 6], sizes = [2, 1], strides = [1, 1]} : vector<2x8xf32> to vector<2x1xf32>
    %166 = vector.extract_strided_slice %2 {offsets = [6, 0], sizes = [1, 8], strides = [1, 1]} : vector<8x8xf32> to vector<1x8xf32>
    %167 = vector.broadcast %165 : vector<2x1xf32> to vector<2x8xf32>
    %168 = vector.broadcast %166 : vector<1x8xf32> to vector<2x8xf32>
    %169 = arith.mulf %167, %168 : vector<2x8xf32>
    %170 = arith.addf %164, %169 : vector<2x8xf32>
    %171 = vector.extract_strided_slice %127 {offsets = [0, 7], sizes = [2, 1], strides = [1, 1]} : vector<2x8xf32> to vector<2x1xf32>
    %172 = vector.extract_strided_slice %2 {offsets = [7, 0], sizes = [1, 8], strides = [1, 1]} : vector<8x8xf32> to vector<1x8xf32>
    %173 = vector.broadcast %171 : vector<2x1xf32> to vector<2x8xf32>
    %174 = vector.broadcast %172 : vector<1x8xf32> to vector<2x8xf32>
    %175 = arith.mulf %173, %174 : vector<2x8xf32>
    %176 = arith.addf %170, %175 : vector<2x8xf32>
    %177 = arith.addf %176, %7 : vector<2x8xf32>
    %c0_34 = arith.constant 0 : index
    %c0_35 = arith.constant 0 : index
    %178 = vector.load %arg4[%c0_34, %c0_35] : memref<2x8xf32, #tpu.memory_space<vmem>>, vector<2x8xf32>
    tpu.vector_store %arg4[%c0_34, %c0_35], %177 {strides = array<i32>} : memref<2x8xf32, #tpu.memory_space<vmem>>, vector<2x8xf32>,
    return
  }
  func.func @transform_0(%arg0: i32) -> (i32, i32) {
    %c0_i32 = arith.constant 0 : i32
    %c0_i32_0 = arith.constant 0 : i32
    return %arg0, %c0_i32 : i32, i32
  }
  func.func @transform_1(%arg0: i32) -> (i32, i32) {
    %c0_i32 = arith.constant 0 : i32
    %c0_i32_0 = arith.constant 0 : i32
    %c0_i32_1 = arith.constant 0 : i32
    return %c0_i32, %c0_i32_0 : i32, i32
  }
  func.func @transform_2(%arg0: i32) -> (i32, i32) {
    %c0_i32 = arith.constant 0 : i32
    %c0_i32_0 = arith.constant 0 : i32
    %c0_i32_1 = arith.constant 0 : i32
    return %c0_i32, %c0_i32_0 : i32, i32
  }
  func.func @transform_3(%arg0: i32) -> (i32, i32) {
    %c0_i32 = arith.constant 0 : i32
    %c0_i32_0 = arith.constant 0 : i32
    return %arg0, %c0_i32 : i32, i32
  }
}

</mosaic_0001>

<llo_original>
// kernel: tpu_custom_call.1
$region0: #{tpu_custom_call.1}
  #allocation0 [shape = 'u32[]', space=smem, size = 0x4, offset = 0x4, fixed_abs, tag = 'smem constant byte address 0x4 - core index']
  #allocation1 [shape = 'u32[144,128]{1,0:T(1,128)}', space=vmem, size = 0x12000, scoped, tag = 'internal scratch']
  %s0 = inlined_call_operand.hbm [shape: s32[2,7], index: 0, kind: input, shape index: {}]
  %s1 = inlined_call_operand.vmem [shape: f32[1,8], index: 1, kind: input, shape index: {}]
  %s2 = inlined_call_operand.hbm [shape: f32[8,8], index: 2, kind: input, shape index: {}]
  %s3 = inlined_call_operand.hbm [shape: f32[2,8], index: 3, kind: output, shape index: {}]
  %s4 = sld [smem:[#allocation0]]
  $region30: #{tpu_custom_call.1} parent=0
    _
  %s6 = ssub.s32 1, %s4
  %s7 = scalar_select 0, %s6, %s4
  $region1: #{tpu_custom_call.1} parent=0
    #allocation2 [shape = 'u8[1024]{0}', space=vmem, size = 0x400, scoped, tag = 'input window, operand 0, single buffered']
    #allocation3 [shape = 's32[1]{0}', space=sflag, size = 0x4, scoped, tag = 'scoped memory for tpu_custom_call.1']
    #allocation4 [shape = 's32[1]{0}', space=sflag, size = 0x4, scoped, tag = 'scoped memory for tpu_custom_call.1']
    #allocation5 [shape = 'u8[4096]{0}', space=vmem, size = 0x1000, scoped, tag = 'input window, operand 2, single buffered']
    #allocation6 [shape = 's32[1]{0}', space=sflag, size = 0x4, scoped, tag = 'scoped memory for tpu_custom_call.1']
    #allocation7 [shape = 'u8[1024]{0}', space=vmem, size = 0x400, scoped, tag = 'output window, operand 0, single buffered']
    %8 = vsyncpa [#allocation3], 0
    %9 = vsyncpa [#allocation6], 0
    %10 = vsyncpa [#allocation4], 0
    // Predicated region
    $region2: #{tpu_custom_call.1} parent=1 // pred_check
      _
    $region3: #{tpu_custom_call.1} parent=1 // pred_check_branch
      %12 = sbr.rel (0) target = $region5
    $region4: #{tpu_custom_call.1} parent=1 // pred_region
      %s14 = ssub.s32 32, 32
      %15 = vsyncadd [#allocation3], %s14
      %s17 = sshll.u32 [#allocation2], 4
      %s18 = int_to_ptr.vmem [resolvable:$true] %s17
      %20 = dma.hbm_to_vmem [thread:$0]  %s0, 32, %s18, [#allocation3]
    $region5: #{tpu_custom_call.1} parent=1 // pred_fallthru
      _
    // Predicated region
    $region6: #{tpu_custom_call.1} parent=1 // pred_check
      _
    $region7: #{tpu_custom_call.1} parent=1 // pred_check_branch
      %22 = sbr.rel (0) target = $region9
    $region8: #{tpu_custom_call.1} parent=1 // pred_region
      _
    $region9: #{tpu_custom_call.1} parent=1 // pred_fallthru
      _
    // Predicated region
    $region10: #{tpu_custom_call.1} parent=1 // pred_check
      _
    $region11: #{tpu_custom_call.1} parent=1 // pred_check_branch
      %24 = sbr.rel (0) target = $region13
    $region12: #{tpu_custom_call.1} parent=1 // pred_region
      %s26 = ssub.s32 128, 128
      %27 = vsyncadd [#allocation6], %s26
      %s29 = sshll.u32 [#allocation5], 4
      %s30 = int_to_ptr.vmem [resolvable:$true] %s29
      %32 = dma.hbm_to_vmem [thread:$0]  %s2, 128, %s30, [#allocation6]
    $region13: #{tpu_custom_call.1} parent=1 // pred_fallthru
      _
    // Predicated region
    $region14: #{tpu_custom_call.1} parent=1 // pred_check
      _
    $region15: #{tpu_custom_call.1} parent=1 // pred_check_branch
      %34 = sbr.rel (0) target = $region17
    $region16: #{tpu_custom_call.1} parent=1 // pred_region
      %35 = dma.done [#allocation3], 32
    $region17: #{tpu_custom_call.1} parent=1 // pred_fallthru
      _
    // Predicated region
    $region18: #{tpu_custom_call.1} parent=1 // pred_check
      _
    $region19: #{tpu_custom_call.1} parent=1 // pred_check_branch
      %37 = sbr.rel (0) target = $region21
    $region20: #{tpu_custom_call.1} parent=1 // pred_region
      %38 = dma.done [#allocation6], 128
    $region21: #{tpu_custom_call.1} parent=1 // pred_fallthru
      _
    %v39 = vld [vmem:[#allocation2] sm:$0x3]
    %v40 = vld [vmem:[%s1] sm:$0x1]
    %v41 = vld [vmem:[#allocation5] sm:$0xff]
    %v42 = vlaneseq
    %v43 = vand.u32 %v42, 127
    %vm44 = vcmp.eq.s32.totalorder %v43, 2
    %v45 = vsel %vm44, 1, 0
    %v46 = vcvt.s32.f32 %v45
    %vm47 = vcmp.eq.s32.totalorder %v39, 0
    %v48 = vsel %vm47, 1, 0
    %v49 = vcvt.s32.f32 %v48
    %vm50 = vcmask 50176
    %v51 = vsel %vm50, %v49, 0.0
    %52 = vadd.xlane.f32.xlu0 %v51
    %v53 = vpop.xlane.xlu0 %52
    %vm54 = vcmp.eq.s32.totalorder %v43, 0
    %v55 = vsel %vm54, %v53, 0.0
    %v56 = vadd.f32 %v46, %v55
    %vm57 = vcmp.eq.s32.totalorder %v39, 1
    %v58 = vsel %vm57, 1, 0
    %v59 = vcvt.s32.f32 %v58
    %v60 = vsel %vm50, %v59, 0.0
    %61 = vadd.xlane.f32.xlu0 %v60
    %v62 = vpop.xlane.xlu0 %61
    %vm63 = vcmp.eq.s32.totalorder %v43, 1
    %v64 = vsel %vm63, %v62, 0.0
    %v65 = vadd.f32 %v56, %v64
    %vm66 = vcmp.eq.s32.totalorder %v39, 2
    %v67 = vsel %vm66, 1, 0
    %v68 = vcvt.s32.f32 %v67
    %v69 = vsel %vm50, %v68, 0.0
    %70 = vadd.xlane.f32.xlu0 %v69
    %v71 = vpop.xlane.xlu0 %70
    %v72 = vsel %vm44, %v71, 0.0
    %v73 = vadd.f32 %v65, %v72
    %vm74 = vcmp.eq.s32.totalorder %v39, 3
    %v75 = vsel %vm74, 1, 0
    %v76 = vcvt.s32.f32 %v75
    %v77 = vsel %vm50, %v76, 0.0
    %78 = vadd.xlane.f32.xlu0 %v77
    %v79 = vpop.xlane.xlu0 %78
    %vm80 = vcmp.eq.s32.totalorder %v43, 3
    %v81 = vsel %vm80, %v79, 0.0
    %v82 = vadd.f32 %v73, %v81
    %vm83 = vcmp.eq.s32.totalorder %v39, 4
    %v84 = vsel %vm83, 1, 0
    %v85 = vcvt.s32.f32 %v84
    %v86 = vsel %vm50, %v85, 0.0
    %87 = vadd.xlane.f32.xlu0 %v86
    %v88 = vpop.xlane.xlu0 %87
    %vm89 = vcmp.eq.s32.totalorder %v43, 4
    %v90 = vsel %vm89, %v88, 0.0
    %v91 = vadd.f32 %v82, %v90
    %vm92 = vcmp.eq.s32.totalorder %v39, 5
    %v93 = vsel %vm92, 1, 0
    %v94 = vcvt.s32.f32 %v93
    %v95 = vsel %vm50, %v94, 0.0
    %96 = vadd.xlane.f32.xlu0 %v95
    %v97 = vpop.xlane.xlu0 %96
    %vm98 = vcmp.eq.s32.totalorder %v43, 5
    %v99 = vsel %vm98, %v97, 0.0
    %v100 = vadd.f32 %v91, %v99
    %vm101 = vcmp.eq.s32.totalorder %v39, 6
    %v102 = vsel %vm101, 1, 0
    %v103 = vcvt.s32.f32 %v102
    %v104 = vsel %vm50, %v103, 0.0
    %105 = vadd.xlane.f32.xlu0 %v104
    %v106 = vpop.xlane.xlu0 %105
    %vm107 = vcmp.eq.s32.totalorder %v43, 6
    %v108 = vsel %vm107, %v106, 0.0
    %v109 = vadd.f32 %v100, %v108
    %vm110 = vcmp.eq.s32.totalorder %v39, 7
    %v111 = vsel %vm110, 1, 0
    %v112 = vcvt.s32.f32 %v111
    %v113 = vsel %vm50, %v112, 0.0
    %114 = vadd.xlane.f32.xlu0 %v113
    %v115 = vpop.xlane.xlu0 %114
    %vm116 = vcmp.eq.s32.totalorder %v43, 7
    %v117 = vsel %vm116, %v115, 0.0
    %v118 = vadd.f32 %v109, %v117
    %v120 = vlaneseq
    %v121 = vshrl.u32 %v120, 7
    %v122 = vsub.s32 0, %v121
    %v123 = vrot.slane %v40, %v122
    %vm125 = vcmp.gt.f32.partialorder %v118, 0.0
    %v126 = vsel %vm125, %v123, -inf
    %vm127 = vcmask 58368
    %v128 = vsel %vm127, %v126, -inf
    %129 = vmax.xlane.f32.xlu0 %v128
    %v130 = vpop.xlane.xlu0 %129
    %v131 = vsub.f32 %v123, %v130
    %v132 = vmul.f32 %v131, 1.442695
    %v133 = vpow.pop %v132
    %v134 = vmul.f32 %v118, %v133
    %v135 = vsel %vm127, %v134, 0.0
    %136 = vadd.xlane.f32.xlu0 %v135
    %v137 = vpop.xlane.xlu0 %136
    %v138 = vrcp.pop %v137
    %v139 = vmul.f32 %v134, %v138
    %141 = vset.pattern.permute.xlu0 0
    %142 = vperm.xlu0 %141, %v139
    %v143 = vpop.permute.xlu0 %142
    %v145 = vlaneseq
    %v146 = vshrl.u32 %v145, 7
    %v147 = vsub.s32 0, %v146
    %v148 = vrot.slane %v41, %v147
    %v149 = vmul.f32 %v143, %v148
    %v150 = vadd.f32 %v149, 0.0
    %151 = vset.pattern.permute.xlu0 1
    %152 = vperm.xlu0 %151, %v139
    %v153 = vpop.permute.xlu0 %152
    %v155 = vlaneseq
    %v156 = vshrl.u32 %v155, 7
    %v157 = vsub.s32 1, %v156
    %v158 = vrot.slane %v41, %v157
    %v159 = vmul.f32 %v153, %v158
    %v160 = vadd.f32 %v150, %v159
    %161 = vset.pattern.permute.xlu0 2
    %162 = vperm.xlu0 %161, %v139
    %v163 = vpop.permute.xlu0 %162
    %v165 = vlaneseq
    %v166 = vshrl.u32 %v165, 7
    %v167 = vsub.s32 2, %v166
    %v168 = vrot.slane %v41, %v167
    %v169 = vmul.f32 %v163, %v168
    %v170 = vadd.f32 %v160, %v169
    %171 = vset.pattern.permute.xlu0 3
    %172 = vperm.xlu0 %171, %v139
    %v173 = vpop.permute.xlu0 %172
    %v175 = vlaneseq
    %v176 = vshrl.u32 %v175, 7
    %v177 = vsub.s32 3, %v176
    %v178 = vrot.slane %v41, %v177
    %v179 = vmul.f32 %v173, %v178
    %v180 = vadd.f32 %v170, %v179
    %181 = vset.pattern.permute.xlu0 4
    %182 = vperm.xlu0 %181, %v139
    %v183 = vpop.permute.xlu0 %182
    %v185 = vlaneseq
    %v186 = vshrl.u32 %v185, 7
    %v187 = vsub.s32 4, %v186
    %v188 = vrot.slane %v41, %v187
    %v189 = vmul.f32 %v183, %v188
    %v190 = vadd.f32 %v180, %v189
    %191 = vset.pattern.permute.xlu0 5
    %192 = vperm.xlu0 %191, %v139
    %v193 = vpop.permute.xlu0 %192
    %v195 = vlaneseq
    %v196 = vshrl.u32 %v195, 7
    %v197 = vsub.s32 5, %v196
    %v198 = vrot.slane %v41, %v197
    %v199 = vmul.f32 %v193, %v198
    %v200 = vadd.f32 %v190, %v199
    %201 = vset.pattern.permute.xlu0 6
    %202 = vperm.xlu0 %201, %v139
    %v203 = vpop.permute.xlu0 %202
    %v205 = vlaneseq
    %v206 = vshrl.u32 %v205, 7
    %v207 = vsub.s32 6, %v206
    %v208 = vrot.slane %v41, %v207
    %v209 = vmul.f32 %v203, %v208
    %v210 = vadd.f32 %v200, %v209
    %211 = vset.pattern.permute.xlu0 7
    %212 = vperm.xlu0 %211, %v139
    %v213 = vpop.permute.xlu0 %212
    %v215 = vlaneseq
    %v216 = vshrl.u32 %v215, 7
    %v217 = vsub.s32 7, %v216
    %v218 = vrot.slane %v41, %v217
    %v219 = vmul.f32 %v213, %v218
    %v220 = vadd.f32 %v210, %v219
    %v221 = vadd.f32 %v220, %v46
    %222 = vst.msk [vmem:[#allocation7] sm:$0x3] %vm127, %v221
    // Predicated region
    $region22: #{tpu_custom_call.1} parent=1 // pred_check
      _
    $region23: #{tpu_custom_call.1} parent=1 // pred_check_branch
      %224 = sbr.rel (0) target = $region25
    $region24: #{tpu_custom_call.1} parent=1 // pred_region
      %s226 = ssub.s32 32, 32
      %227 = vsyncadd [#allocation4], %s226
      %s229 = sshll.u32 [#allocation7], 4
      %s230 = int_to_ptr.vmem [resolvable:$true] %s229
      %232 = dma.vmem_to_hbm [thread:$0]  %s230, 32, %s3, [#allocation4]
    $region25: #{tpu_custom_call.1} parent=1 // pred_fallthru
      _
    // Predicated region
    $region26: #{tpu_custom_call.1} parent=1 // pred_check
      _
    $region27: #{tpu_custom_call.1} parent=1 // pred_check_branch
      %234 = sbr.rel (0) target = $region29
    $region28: #{tpu_custom_call.1} parent=1 // pred_region
      %235 = dma.done [#allocation4], 32
    $region29: #{tpu_custom_call.1} parent=1 // pred_fallthru
      _
    %236 = vsyncpa [#allocation3], 1
    %237 = vsyncpa [#allocation6], 1
    %238 = vsyncpa [#allocation4], 1

</llo_original>
